<compile_context>
chip_gen: v5e
topology: v5e:2x2
jax: 0.10.0
libtpu: 0.0.40
codegen_flags: <defaults>
</compile_context>

<pallas_src>
import functools

import jax
import jax.numpy as jnp
from jax.experimental import pallas as pl
from jax.experimental.pallas import tpu as pltpu


def _sublane_multiple(dtype):
    # Minimum sublane tile: 8 rows for 32-bit, 16 for bf16, 32 for int8.
    itemsize = jnp.dtype(dtype).itemsize
    return 8 * max(1, 4 // itemsize)


def _vmem_budgets():
    """Generation-aware (tile footprint budget, scoped VMEM limit)."""
    try:
        cap = int(pltpu.get_tpu_info().vmem_capacity_bytes)
    except Exception:
        cap = 64 * 1024 * 1024  # conservative fallback: v7x per-TensorCore VMEM
    # v5e/v6e (128 MiB) -> 64 MiB scoped limit; v7x (64 MiB) -> 48 MiB.
    limit = min(64 * 1024 * 1024, (cap * 3) // 4)
    # Budget for 2 inputs x 2 pipeline buffers + f32 intermediates, with
    # headroom for output buffers / compiler scratch.
    footprint = (limit * 3) // 4
    return footprint, limit


def _choose_block_batch(batch, features, in_dtypes, vmem_footprint_bytes,
                        min_splits=2):
    """Pick the batch tile from the VMEM budget (no arbitrary row cap)."""
    f_pad = 128 * pl.cdiv(features, 128)
    in_bytes_row = sum(jnp.dtype(d).itemsize for d in in_dtypes) * f_pad
    # f32 compute intermediates (sigmoid output, upcast labels, product slack).
    interm_bytes_row = 3 * 4 * f_pad
    bytes_per_row = 2 * in_bytes_row + interm_bytes_row  # 2 pipeline buffers
    rows_by_vmem = max(1, vmem_footprint_bytes // max(1, bytes_per_row))

    # ~8 MiB per single input buffer is already far past the DMA efficiency
    # plateau (~1 MiB blocks reach ~85% of HBM roofline); bigger only burns VMEM.
    max_in_row = max(jnp.dtype(d).itemsize for d in in_dtypes) * f_pad
    rows_cap = max(2048, (8 * 1024 * 1024) // max(1, max_in_row))

    mult = max(_sublane_multiple(d) for d in in_dtypes)
    batch_padded = mult * pl.cdiv(batch, mult)

    block = min(rows_by_vmem, rows_cap, batch_padded)
    # Keep >= min_splits grid steps when the batch allows: both v7x
    # TensorCores get work and DMA/compute can overlap on 1-TC chips.
    if batch_padded >= min_splits * mult:
        per_split = mult * pl.cdiv(pl.cdiv(batch_padded, min_splits), mult)
        block = min(block, per_split)

    block = max(mult, (block // mult) * mult)
    if block >= batch:
        block = batch  # whole batch as one full-dim block (always legal)
    return block


def _fbeta_kernel(logits_ref, labels_ref, fs_ref, *, beta, small_value,
                  batch_size, block_batch):
    i = pl.program_id(0)

    # Upcast once to f32 (inputs may arrive bf16 to cut HBM traffic).
    x = logits_ref[...].astype(jnp.float32)
    l = labels_ref[...].astype(jnp.float32)

    # EUP-friendly sigmoid: exp + approx reciprocal both run off the VALU,
    # keeping the kernel pinned to the DMA roofline after input compression.
    p = pl.reciprocal(1.0 + jnp.exp(-x), approx=True)

    num_pos = jnp.sum(p, axis=1, keepdims=True) + small_value
    num_pos_hat = jnp.sum(l, axis=1, keepdims=True) + small_value
    tp = jnp.sum(l * p, axis=1, keepdims=True)

    precise = tp / num_pos
    recall = tp / num_pos_hat
    b2 = beta * beta
    fs = (1.0 + b2) * precise * recall / (b2 * precise + recall + small_value)

    # Mask rows past the real batch (last, possibly partial, block).  This also
    # scrubs any NaN/Inf arising from garbage in padded input rows.
    row = i * block_batch + jax.lax.broadcasted_iota(jnp.int32, fs.shape, 0)
    fs_ref[...] = jnp.where(row < batch_size, fs, 0.0)


def fbeta_loss(logits, labels, *, beta=2, small_value=1e-6,
               block_batch=None, compress_inputs=True,
               vmem_limit_bytes=None):
    """Pallas TPU implementation of FbetaLoss.forward (returns scalar)."""
    assert logits.shape == labels.shape and logits.ndim == 2
    B, F = logits.shape

    if compress_inputs:
        # Memory-bound kernel: halve input bytes; the kernel upcasts to f32.
        # (0/1 labels are exact in bf16; soft labels lose <0.4% precision.)
        if logits.dtype == jnp.float32:
            logits = logits.astype(jnp.bfloat16)
        if labels.dtype == jnp.float32:
            labels = labels.astype(jnp.bfloat16)

    footprint, derived_limit = _vmem_budgets()
    if vmem_limit_bytes is None:
        vmem_limit_bytes = derived_limit

    if block_batch is None:
        block_batch = _choose_block_batch(
            B, F, (logits.dtype, labels.dtype), footprint)
    grid = (pl.cdiv(B, block_batch),)

    kernel = functools.partial(
        _fbeta_kernel,
        beta=float(beta),
        small_value=float(small_value),
        batch_size=B,
        block_batch=block_batch,
    )

    fs_rows = pl.pallas_call(
        kernel,
        out_shape=jax.ShapeDtypeStruct((B, 1), jnp.float32),
        grid_spec=pltpu.PrefetchScalarGridSpec(
            num_scalar_prefetch=0,
            grid=grid,
            in_specs=[
                pl.BlockSpec((block_batch, F), lambda i: (i, 0)),
                pl.BlockSpec((block_batch, F), lambda i: (i, 0)),
            ],
            out_specs=pl.BlockSpec((block_batch, 1), lambda i: (i, 0)),
        ),
        compiler_params=pltpu.CompilerParams(
            # Per-block independent outputs, no carried state -> fully
            # parallel grid axis (v7x megacore shards the batch).
            dimension_semantics=("parallel",),
            vmem_limit_bytes=vmem_limit_bytes,
        ),
    )(logits, labels)

    # Tiny epilogue: sum of per-row F-beta scores, then 1 - mean.
    return 1.0 - jnp.sum(fs_rows) / jnp.float32(B)


def fbeta_loss_ref(logits, labels, beta=2, small_value=1e-6):
    # Pure-JAX reference mirroring the PyTorch module (f32 throughout).
    p = jax.nn.sigmoid(logits.astype(jnp.float32))
    l = labels.astype(jnp.float32)
    num_pos = jnp.sum(p, axis=1) + small_value
    num_pos_hat = jnp.sum(l, axis=1) + small_value
    tp = jnp.sum(l * p, axis=1)
    precise = tp / num_pos
    recall = tp / num_pos_hat
    b2 = beta * beta
    fs = (1 + b2) * precise * recall / (b2 * precise + recall + small_value)
    return 1.0 - fs.sum() / logits.shape[0]


if __name__ == "__main__":
    key = jax.random.PRNGKey(0)
    k1, k2, k3, k4, k5, k6 = jax.random.split(key, 6)

    # Case 1: small batch, default path (bf16-compressed inputs, auto tile).
    B, F = 8, 128
    logits = jax.random.normal(k1, (B, F), dtype=jnp.float32)
    labels = (jax.random.uniform(k2, (B, F)) > 0.5).astype(jnp.float32)
    ref = fbeta_loss_ref(logits, labels, beta=2)
    out = jax.block_until_ready(fbeta_loss(logits, labels, beta=2))
    assert jnp.allclose(out, ref, atol=1e-2, rtol=1e-2), (out, ref)

    # Case 2: exact f32 inputs (no compression) -> tighter check.
    out_f32 = jax.block_until_ready(
        fbeta_loss(logits, labels, beta=2, compress_inputs=False))
    assert jnp.allclose(out_f32, ref, atol=5e-3, rtol=5e-3), (out_f32, ref)

    # Case 3: ragged batch + forced small f32 tile (partial last block + mask).
    B2, F2 = 13, 256
    logits2 = jax.random.normal(k3, (B2, F2), dtype=jnp.float32)
    labels2 = (jax.random.uniform(k4, (B2, F2)) > 0.5).astype(jnp.float32)
    ref2 = fbeta_loss_ref(logits2, labels2, beta=2)
    out2 = jax.block_until_ready(
        fbeta_loss(logits2, labels2, beta=2, block_batch=8,
                   compress_inputs=False))
    assert jnp.allclose(out2, ref2, atol=5e-3, rtol=5e-3), (out2, ref2)

    # Case 4: compressed (bf16) inputs with a forced 16-row tile and a ragged
    # batch -> exercises the padded-partial-block masking path with bf16 tiles.
    B3, F3 = 40, 256
    logits3 = jax.random.normal(k5, (B3, F3), dtype=jnp.float32)
    labels3 = (jax.random.uniform(k6, (B3, F3)) > 0.5).astype(jnp.float32)
    ref3 = fbeta_loss_ref(logits3, labels3, beta=2)
    out3 = jax.block_until_ready(
        fbeta_loss(logits3, labels3, beta=2, block_batch=16))
    assert jnp.allclose(out3, ref3, atol=1e-2, rtol=1e-2), (out3, ref3)

    print("KERNEL_OK")
</pallas_src>

<mosaic_0001>
module attributes {stable_mosaic.version = 11 : i64} {
  func.func @_fbeta_kernel(%arg0: i32, %arg1: memref<8x128xbf16, #tpu.memory_space<vmem>>, %arg2: memref<8x128xbf16, #tpu.memory_space<vmem>>, %arg3: memref<8x1xf32, #tpu.memory_space<vmem>>) attributes {dimension_semantics = [#tpu.dimension_semantics<parallel>], iteration_bounds = array<i64: 1>, scalar_prefetch = 0 : i64, scratch_operands = 0 : i64, tpu.core_type = #tpu.core_type<tc>, window_params = [{transform_indices = @transform_0, window_bounds = array<i64: 8, 128>}, {transform_indices = @transform_1, window_bounds = array<i64: 8, 128>}, {transform_indices = @transform_2, window_bounds = array<i64: 8, 1>}]} {
    %c0 = arith.constant 0 : index
    %c0_0 = arith.constant 0 : index
    %0 = vector.load %arg1[%c0, %c0_0] : memref<8x128xbf16, #tpu.memory_space<vmem>>, vector<8x128xbf16>
    %1 = arith.extf %0 : vector<8x128xbf16> to vector<8x128xf32>
    %c0_1 = arith.constant 0 : index
    %c0_2 = arith.constant 0 : index
    %2 = vector.load %arg2[%c0_1, %c0_2] : memref<8x128xbf16, #tpu.memory_space<vmem>>, vector<8x128xbf16>
    %3 = arith.extf %2 : vector<8x128xbf16> to vector<8x128xf32>
    %cst = arith.constant 0.000000e+00 : f32
    %4 = vector.broadcast %cst : f32 to vector<8x128xf32>
    %5 = arith.subf %4, %1 : vector<8x128xf32>
    %6 = math.exp %5 : vector<8x128xf32>
    %cst_3 = arith.constant 1.000000e+00 : f32
    %7 = vector.broadcast %cst_3 : f32 to vector<8x128xf32>
    %8 = arith.addf %7, %6 : vector<8x128xf32>
    %9 = tpu.reciprocal %8 {approx = true} : vector<8x128xf32> -> vector<8x128xf32>
    %cst_4 = arith.constant dense<0.000000e+00> : vector<8xf32>
    %10 = vector.multi_reduction <add>, %9, %cst_4 [1] : vector<8x128xf32> to vector<8xf32>
    %11 = vector.shape_cast %10 : vector<8xf32> to vector<8x1xf32>
    %cst_5 = arith.constant 9.99999997E-7 : f32
    %12 = vector.broadcast %cst_5 : f32 to vector<8x1xf32>
    %13 = arith.addf %11, %12 : vector<8x1xf32>
    %cst_6 = arith.constant dense<0.000000e+00> : vector<8xf32>
    %14 = vector.multi_reduction <add>, %3, %cst_6 [1] : vector<8x128xf32> to vector<8xf32>
    %15 = vector.shape_cast %14 : vector<8xf32> to vector<8x1xf32>
    %cst_7 = arith.constant 9.99999997E-7 : f32
    %16 = vector.broadcast %cst_7 : f32 to vector<8x1xf32>
    %17 = arith.addf %15, %16 : vector<8x1xf32>
    %18 = arith.mulf %3, %9 : vector<8x128xf32>
    %cst_8 = arith.constant dense<0.000000e+00> : vector<8xf32>
    %19 = vector.multi_reduction <add>, %18, %cst_8 [1] : vector<8x128xf32> to vector<8xf32>
    %20 = vector.shape_cast %19 : vector<8xf32> to vector<8x1xf32>
    %21 = arith.divf %20, %13 : vector<8x1xf32>
    %22 = arith.divf %20, %17 : vector<8x1xf32>
    %cst_9 = arith.constant 5.000000e+00 : f32
    %23 = vector.broadcast %cst_9 : f32 to vector<8x1xf32>
    %24 = arith.mulf %23, %21 : vector<8x1xf32>
    %25 = arith.mulf %24, %22 : vector<8x1xf32>
    %cst_10 = arith.constant 4.000000e+00 : f32
    %26 = vector.broadcast %cst_10 : f32 to vector<8x1xf32>
    %27 = arith.mulf %26, %21 : vector<8x1xf32>
    %28 = arith.addf %27, %22 : vector<8x1xf32>
    %cst_11 = arith.constant 9.99999997E-7 : f32
    %29 = vector.broadcast %cst_11 : f32 to vector<8x1xf32>
    %30 = arith.addf %28, %29 : vector<8x1xf32>
    %31 = arith.divf %25, %30 : vector<8x1xf32>
    %c8_i32 = arith.constant 8 : i32
    %32 = arith.muli %arg0, %c8_i32 : i32
    %33 = tpu.iota {dimensions = array<i32: 0>} : vector<8x1xi32>
    %34 = vector.broadcast %32 : i32 to vector<8x1xi32>
    %35 = arith.addi %34, %33 : vector<8x1xi32>
    %c8_i32_12 = arith.constant 8 : i32
    %36 = vector.broadcast %c8_i32_12 : i32 to vector<8x1xi32>
    %37 = arith.cmpi slt, %35, %36 : vector<8x1xi32>
    %cst_13 = arith.constant 0.000000e+00 : f32
    %38 = vector.broadcast %cst_13 : f32 to vector<8x1xf32>
    %39 = arith.select %37, %31, %38 : vector<8x1xi1>, vector<8x1xf32>
    %c0_14 = arith.constant 0 : index
    %c0_15 = arith.constant 0 : index
    %40 = vector.load %arg3[%c0_14, %c0_15] : memref<8x1xf32, #tpu.memory_space<vmem>>, vector<8x1xf32>
    tpu.vector_store %arg3[%c0_14, %c0_15], %39 {strides = array<i32>} : memref<8x1xf32, #tpu.memory_space<vmem>>, vector<8x1xf32>,
    return
  }
  func.func @transform_0(%arg0: i32) -> (i32, i32) {
    %c0_i32 = arith.constant 0 : i32
    %c0_i32_0 = arith.constant 0 : i32
    return %arg0, %c0_i32 : i32, i32
  }
  func.func @transform_1(%arg0: i32) -> (i32, i32) {
    %c0_i32 = arith.constant 0 : i32
    %c0_i32_0 = arith.constant 0 : i32
    return %arg0, %c0_i32 : i32, i32
  }
  func.func @transform_2(%arg0: i32) -> (i32, i32) {
    %c0_i32 = arith.constant 0 : i32
    %c0_i32_0 = arith.constant 0 : i32
    return %arg0, %c0_i32 : i32, i32
  }
}

</mosaic_0001>

<llo_original>
// kernel: tpu_custom_call.1
$region0: #{tpu_custom_call.1}
  #allocation0 [shape = 'u32[]', space=smem, size = 0x4, offset = 0x4, fixed_abs, tag = 'smem constant byte address 0x4 - core index']
  #allocation1 [shape = 'u32[72,128]{1,0:T(1,128)}', space=vmem, size = 0x9000, scoped, tag = 'internal scratch']
  %s0 = inlined_call_operand.hbm [shape: bf16[8,128], index: 0, kind: input, shape index: {}]
  %s1 = inlined_call_operand.hbm [shape: bf16[8,128], index: 1, kind: input, shape index: {}]
  %s2 = inlined_call_operand.vmem [shape: f32[8,1], index: 2, kind: output, shape index: {}]
  %s3 = sld [smem:[#allocation0]]
  $region26: #{tpu_custom_call.1} parent=0
    _
  %s5 = ssub.s32 1, %s3
  %s6 = scalar_select 0, %s5, %s3
  $region1: #{tpu_custom_call.1} parent=0
    #allocation2 [shape = 'u8[2048]{0}', space=vmem, size = 0x800, scoped, tag = 'input window, operand 0, single buffered']
    #allocation3 [shape = 's32[1]{0}', space=sflag, size = 0x4, scoped, tag = 'scoped memory for tpu_custom_call.1']
    #allocation4 [shape = 'u8[2048]{0}', space=vmem, size = 0x800, scoped, tag = 'input window, operand 1, single buffered']
    #allocation5 [shape = 's32[1]{0}', space=sflag, size = 0x4, scoped, tag = 'scoped memory for tpu_custom_call.1']
    %7 = vsyncpa [#allocation3], 0
    %8 = vsyncpa [#allocation5], 0
    // Predicated region
    $region2: #{tpu_custom_call.1} parent=1 // pred_check
      _
    $region3: #{tpu_custom_call.1} parent=1 // pred_check_branch
      %10 = sbr.rel (0) target = $region5
    $region4: #{tpu_custom_call.1} parent=1 // pred_region
      %12 = vsyncadd [#allocation3], 0
      %s14 = sshll.u32 %s0, 4
      %s15 = int_to_ptr.hbm [resolvable:$true] %s14
      %s16 = sshll.u32 [#allocation2], 4
      %s17 = int_to_ptr.vmem [resolvable:$true] %s16
      %19 = dma.hbm_to_vmem [thread:$0]  %s15, 64, %s17, [#allocation3]
    $region5: #{tpu_custom_call.1} parent=1 // pred_fallthru
      _
    // Predicated region
    $region6: #{tpu_custom_call.1} parent=1 // pred_check
      _
    $region7: #{tpu_custom_call.1} parent=1 // pred_check_branch
      %21 = sbr.rel (0) target = $region9
    $region8: #{tpu_custom_call.1} parent=1 // pred_region
      %23 = vsyncadd [#allocation5], 0
      %s25 = sshll.u32 %s1, 4
      %s26 = int_to_ptr.hbm [resolvable:$true] %s25
      %s27 = sshll.u32 [#allocation4], 4
      %s28 = int_to_ptr.vmem [resolvable:$true] %s27
      %30 = dma.hbm_to_vmem [thread:$0]  %s26, 64, %s28, [#allocation5]
    $region9: #{tpu_custom_call.1} parent=1 // pred_fallthru
      _
    // Predicated region
    $region10: #{tpu_custom_call.1} parent=1 // pred_check
      _
    $region11: #{tpu_custom_call.1} parent=1 // pred_check_branch
      %32 = sbr.rel (0) target = $region13
    $region12: #{tpu_custom_call.1} parent=1 // pred_region
      %34 = dma.done [#allocation3], 64
    $region13: #{tpu_custom_call.1} parent=1 // pred_fallthru
      _
    // Predicated region
    $region14: #{tpu_custom_call.1} parent=1 // pred_check
      _
    $region15: #{tpu_custom_call.1} parent=1 // pred_check_branch
      %36 = sbr.rel (0) target = $region17
    $region16: #{tpu_custom_call.1} parent=1 // pred_region
      %38 = dma.done [#allocation5], 64
    $region17: #{tpu_custom_call.1} parent=1 // pred_fallthru
      _
    %v39 = vld [vmem:[#allocation2] sm:$0xf]
    %v40 = vunpack.c.l.bf16 %v39
    %v41 = vld [vmem:[#allocation4] sm:$0xf]
    %v42 = vunpack.c.l.bf16 %v41
    %v43 = vsub.f32 0.0, %v40
    %v44 = vmul.f32 %v43, 1.442695
    %v45 = vpow.pop %v44
    %v46 = vadd.f32 %v45, 1.0
    %v47 = vrcp.pop %v46
    %48 = vadd.xlane.f32.xlu0 %v47
    %v49 = vpop.xlane.xlu0 %48
    %v50 = vadd.f32 %v49, 1e-06
    %51 = vadd.xlane.f32.xlu0 %v42
    %v52 = vpop.xlane.xlu0 %51
    %v53 = vadd.f32 %v52, 1e-06
    %v54 = vmul.f32 %v42, %v47
    %55 = vadd.xlane.f32.xlu0 %v54
    %v56 = vpop.xlane.xlu0 %55
    %v57 = vrcp.pop %v50
    %v58 = vmul.f32 %v50, %v57
    %v59 = vsub.f32 1.0, %v58
    %v60 = vmul.f32 %v57, %v59
    %v61 = vadd.f32 %v57, %v60
    %vm62 = vweird.f32 %v50
    %vm63 = vweird.f32 %v57
    %vm64 = vmor %vm62, %vm63
    %v65 = vsel %vm64, %v57, %v61
    %v66 = vand.u32 2147483647, %v50
    %vm67 = vcmp.eq.f32.partialorder %v66, 8.507059e+37
    %v68 = vand.u32 %v50, 2147483648
    %v69 = vor.u32 1.1754944e-38, %v68
    %v70 = vsel %vm67, %v69, %v65
    %v71 = vmul.f32 %v56, %v70
    %v72 = vrcp.pop %v53
    %v73 = vmul.f32 %v53, %v72
    %v74 = vsub.f32 1.0, %v73
    %v75 = vmul.f32 %v72, %v74
    %v76 = vadd.f32 %v72, %v75
    %vm77 = vweird.f32 %v53
    %vm78 = vweird.f32 %v72
    %vm79 = vmor %vm77, %vm78
    %v80 = vsel %vm79, %v72, %v76
    %v81 = vand.u32 2147483647, %v53
    %vm82 = vcmp.eq.f32.partialorder %v81, 8.507059e+37
    %v83 = vand.u32 %v53, 2147483648
    %v84 = vor.u32 1.1754944e-38, %v83
    %v85 = vsel %vm82, %v84, %v80
    %v86 = vmul.f32 %v56, %v85
    %v87 = vmul.f32 %v71, 5.0
    %v88 = vmul.f32 %v87, %v86
    %v89 = vmul.f32 %v71, 4.0
    %v90 = vadd.f32 %v89, %v86
    %v91 = vadd.f32 %v90, 1e-06
    %v92 = vrcp.pop %v91
    %v93 = vmul.f32 %v91, %v92
    %v94 = vsub.f32 1.0, %v93
    %v95 = vmul.f32 %v92, %v94
    %v96 = vadd.f32 %v92, %v95
    %vm97 = vweird.f32 %v91
    %vm98 = vweird.f32 %v92
    %vm99 = vmor %vm97, %vm98
    %v100 = vsel %vm99, %v92, %v96
    %v101 = vand.u32 2147483647, %v91
    %vm102 = vcmp.eq.f32.partialorder %v101, 8.507059e+37
    %v103 = vand.u32 %v91, 2147483648
    %v104 = vor.u32 1.1754944e-38, %v103
    %v105 = vsel %vm102, %v104, %v100
    %v106 = vmul.f32 %v88, %v105
    %s107 = smul.u32 0, 8
    %v108 = vlaneseq
    %v109 = vshrl.u32 %v108, 7
    %v110 = vstv %s107
    %v111 = vadd.s32 %v110, %v109
    %vm112 = vcmp.lt.s32.totalorder %v111, 8
    %v113 = vsel %vm112, %v106, 0.0
    %vm114 = vcmask 7168
    %115 = vst.msk [vmem:[%s2] sm:$0xff] %vm114, %v113
    // Predicated region
    $region18: #{tpu_custom_call.1} parent=1 // pred_check
      _
    $region19: #{tpu_custom_call.1} parent=1 // pred_check_branch
      %117 = sbr.rel (0) target = $region21
    $region20: #{tpu_custom_call.1} parent=1 // pred_region
      _
    $region21: #{tpu_custom_call.1} parent=1 // pred_fallthru
      _
    // Predicated region
    $region22: #{tpu_custom_call.1} parent=1 // pred_check
      _
    $region23: #{tpu_custom_call.1} parent=1 // pred_check_branch
      %119 = sbr.rel (0) target = $region25
    $region24: #{tpu_custom_call.1} parent=1 // pred_region
      _
    $region25: #{tpu_custom_call.1} parent=1 // pred_fallthru
      _
    %120 = vsyncpa [#allocation3], 1
    %121 = vsyncpa [#allocation5], 1

</llo_original>
